<compile_context>
chip_gen: v5e
topology: v5e:2x2
jax: 0.10.0
libtpu: 0.0.40
codegen_flags: <defaults>
</compile_context>

<pallas_src>
import jax
import jax.numpy as jnp
from jax.experimental import pallas as pl
from jax.experimental.pallas import tpu as pltpu


def _value_net_kernel(s_ref, a_ref, w1s_ref, w1a_ref, b1_ref, w2_ref, b2_ref,
                      w3_ref, b3_ref, out_ref):
    """Fused 3-layer MLP on one batch tile.

    s_ref:  (TB, num_inputs)    a_ref:  (TB, num_actions)
    w1s_ref:(num_inputs, H)     w1a_ref:(num_actions, H)   b1_ref: (1, H)
    w2_ref: (H, H)              b2_ref: (1, H)
    w3_ref: (1, H)              b3_ref: (1, 1) in SMEM
    out_ref:(1, TB)   -- batch on the lane axis (lane-dense store)
    """
    # Layer 1: concat([state, action]) @ W1 folded into two matmuls.
    h1 = jnp.dot(s_ref[...], w1s_ref[...], preferred_element_type=jnp.float32)
    h1 = h1 + jnp.dot(a_ref[...], w1a_ref[...],
                      preferred_element_type=jnp.float32)
    h1 = jnp.maximum(h1 + b1_ref[...], 0.0)                 # (TB, H)

    # Layer 2.
    h2 = jnp.dot(h1, w2_ref[...], preferred_element_type=jnp.float32)
    h2 = jnp.maximum(h2 + b2_ref[...], 0.0)                 # (TB, H)

    # Layer 3 (H -> 1): contract over H with w3 as the LHS so the result is a
    # lane-dense (1, TB) row instead of a degenerate N=1 (TB, 1) column.
    y = jax.lax.dot_general(
        w3_ref[...], h2,
        dimension_numbers=(((1,), (1,)), ((), ())),
        preferred_element_type=jnp.float32)                 # (1, TB)
    out_ref[...] = (y + b3_ref[0, 0]).astype(out_ref.dtype)


def _round_up(x, m):
    return (x + m - 1) // m * m


def value_network_forward(state, action, params, *, block_b=128):
    """state: (B, num_inputs), action: (B, num_actions) -> (B, 1) float32."""
    w1s, w1a, b1, w2, b2, w3, b3 = params
    B, num_inputs = state.shape
    num_actions = action.shape[1]
    H = w1s.shape[1]

    # Batch tile: multiple of 8 sublanes; pad B up to a whole number of tiles.
    TB = min(block_b, _round_up(B, 8))
    B_pad = _round_up(B, TB)
    if B_pad != B:
        state = jnp.pad(state, ((0, B_pad - B), (0, 0)))
        action = jnp.pad(action, ((0, B_pad - B), (0, 0)))
    nb = B_pad // TB

    def resident(shape):
        # Constant index_map -> block stays VMEM-resident across grid steps.
        return pl.BlockSpec(shape, lambda i: (0, 0))

    out = pl.pallas_call(
        _value_net_kernel,
        out_shape=jax.ShapeDtypeStruct((1, B_pad), jnp.float32),
        grid=(nb,),
        in_specs=[
            pl.BlockSpec((TB, num_inputs), lambda i: (i, 0)),    # state tile
            pl.BlockSpec((TB, num_actions), lambda i: (i, 0)),   # action tile
            resident((num_inputs, H)),     # W1[:num_inputs, :]
            resident((num_actions, H)),    # W1[num_inputs:, :]
            resident((1, H)),              # b1
            resident((H, H)),              # W2
            resident((1, H)),              # b2
            resident((1, H)),              # w3 (as a row)
            pl.BlockSpec(memory_space=pltpu.MemorySpace.SMEM),   # b3 scalar
        ],
        out_specs=pl.BlockSpec((1, TB), lambda i: (0, i)),
        compiler_params=pltpu.CompilerParams(
            dimension_semantics=("parallel",)),
    )(state, action, w1s, w1a, b1, w2, b2, w3, b3)

    # (1, B_pad) lane-dense row -> (B, 1) column; pure layout plumbing.
    return out[0, :B, None]


def init_value_network_params(key, num_inputs, num_actions, hidden_size,
                              init_w=0.003):
    """Deterministic init mirroring the PyTorch module's __init__.

    linear1/linear2: PyTorch default U(-1/sqrt(fan_in), 1/sqrt(fan_in)).
    linear3: U(-init_w, init_w) for both weight and bias.
    Weights stored as [in_features, out_features]; W1 split row-wise so the
    kernel consumes state/action without a concat; W3 stored as a (1, H) row.
    """
    d_in = num_inputs + num_actions
    k1, k2, k3, k4, k5, k6 = jax.random.split(key, 6)

    def u(k, shape, bound):
        return jax.random.uniform(k, shape, jnp.float32, -bound, bound)

    bound1 = 1.0 / (d_in ** 0.5)
    bound2 = 1.0 / (hidden_size ** 0.5)

    w1 = u(k1, (d_in, hidden_size), bound1)
    b1 = u(k2, (1, hidden_size), bound1)
    w2 = u(k3, (hidden_size, hidden_size), bound2)
    b2 = u(k4, (1, hidden_size), bound2)
    w3 = u(k5, (1, hidden_size), init_w)
    b3 = u(k6, (1, 1), init_w)

    w1s, w1a = w1[:num_inputs], w1[num_inputs:]
    return (w1s, w1a, b1, w2, b2, w3, b3)


def _reference_forward(state, action, params):
    """Pure-JAX reference for correctness checking."""
    w1s, w1a, b1, w2, b2, w3, b3 = params
    x = jnp.concatenate([state, action], axis=1)
    w1 = jnp.concatenate([w1s, w1a], axis=0)
    h = jnp.maximum(x @ w1 + b1, 0.0)
    h = jnp.maximum(h @ w2 + b2, 0.0)
    return h @ w3.T + b3


if __name__ == "__main__":
    key = jax.random.PRNGKey(0)
    k_param, k_state, k_action = jax.random.split(key, 3)

    batch = 256
    num_inputs = 6
    num_actions = 2
    hidden_size = 32

    params = init_value_network_params(k_param, num_inputs, num_actions,
                                       hidden_size)
    state = jax.random.normal(k_state, (batch, num_inputs), jnp.float32)
    action = jax.random.normal(k_action, (batch, num_actions), jnp.float32)

    out = value_network_forward(state, action, params)
    out = jax.block_until_ready(out)

    ref = _reference_forward(state, action, params)
    assert out.shape == (batch, 1), out.shape
    assert jnp.allclose(out, ref, atol=1e-4, rtol=1e-4), float(
        jnp.max(jnp.abs(out - ref)))

    print("KERNEL_OK")
</pallas_src>

<mosaic_0001>
module attributes {stable_mosaic.version = 11 : i64} {
  func.func @_value_net_kernel(%arg0: i32, %arg1: memref<128x6xf32, #tpu.memory_space<vmem>>, %arg2: memref<128x2xf32, #tpu.memory_space<vmem>>, %arg3: memref<6x32xf32, #tpu.memory_space<vmem>>, %arg4: memref<2x32xf32, #tpu.memory_space<vmem>>, %arg5: memref<1x32xf32, #tpu.memory_space<vmem>>, %arg6: memref<32x32xf32, #tpu.memory_space<vmem>>, %arg7: memref<1x32xf32, #tpu.memory_space<vmem>>, %arg8: memref<1x32xf32, #tpu.memory_space<vmem>>, %arg9: memref<1x1xf32, #tpu.memory_space<smem>>, %arg10: memref<1x128xf32, #tpu.memory_space<vmem>>) attributes {dimension_semantics = [#tpu.dimension_semantics<parallel>], iteration_bounds = array<i64: 2>, scalar_prefetch = 0 : i64, scratch_operands = 0 : i64, tpu.core_type = #tpu.core_type<tc>, window_params = [{transform_indices = @transform_0, window_bounds = array<i64: 128, 6>}, {transform_indices = @transform_1, window_bounds = array<i64: 128, 2>}, {pipeline_mode = #tpu.pipeline_mode<synchronous>, transform_indices = @transform_2, window_bounds = array<i64: 6, 32>}, {pipeline_mode = #tpu.pipeline_mode<synchronous>, transform_indices = @transform_3, window_bounds = array<i64: 2, 32>}, {pipeline_mode = #tpu.pipeline_mode<synchronous>, transform_indices = @transform_4, window_bounds = array<i64: 1, 32>}, {pipeline_mode = #tpu.pipeline_mode<synchronous>, transform_indices = @transform_5, window_bounds = array<i64: 32, 32>}, {pipeline_mode = #tpu.pipeline_mode<synchronous>, transform_indices = @transform_6, window_bounds = array<i64: 1, 32>}, {pipeline_mode = #tpu.pipeline_mode<synchronous>, transform_indices = @transform_7, window_bounds = array<i64: 1, 32>}, {transform_indices = @transform_8, window_bounds = array<i64: 1, 1>}, {transform_indices = @transform_9, window_bounds = array<i64: 1, 128>}]} {
    %c0 = arith.constant 0 : index
    %c0_0 = arith.constant 0 : index
    %0 = vector.load %arg1[%c0, %c0_0] : memref<128x6xf32, #tpu.memory_space<vmem>>, vector<128x6xf32>
    %c0_1 = arith.constant 0 : index
    %c0_2 = arith.constant 0 : index
    %1 = vector.load %arg3[%c0_1, %c0_2] : memref<6x32xf32, #tpu.memory_space<vmem>>, vector<6x32xf32>
    %cst = arith.constant dense<0.000000e+00> : vector<128x32xf32>
    %2 = tpu.matmul %0, %1, %cst {dimension_numbers = #tpu.dot_dimension_numbers<[1], [0], [0], [1], [0, 0, 1, 1], [], []>} : vector<128x6xf32>, vector<6x32xf32>, vector<128x32xf32> -> vector<128x32xf32>
    %c0_3 = arith.constant 0 : index
    %c0_4 = arith.constant 0 : index
    %3 = vector.load %arg2[%c0_3, %c0_4] : memref<128x2xf32, #tpu.memory_space<vmem>>, vector<128x2xf32>
    %c0_5 = arith.constant 0 : index
    %c0_6 = arith.constant 0 : index
    %4 = vector.load %arg4[%c0_5, %c0_6] : memref<2x32xf32, #tpu.memory_space<vmem>>, vector<2x32xf32>
    %cst_7 = arith.constant dense<0.000000e+00> : vector<128x32xf32>
    %5 = tpu.matmul %3, %4, %cst_7 {dimension_numbers = #tpu.dot_dimension_numbers<[1], [0], [0], [1], [0, 0, 1, 1], [], []>} : vector<128x2xf32>, vector<2x32xf32>, vector<128x32xf32> -> vector<128x32xf32>
    %6 = arith.addf %2, %5 : vector<128x32xf32>
    %c0_8 = arith.constant 0 : index
    %c0_9 = arith.constant 0 : index
    %7 = vector.load %arg5[%c0_8, %c0_9] : memref<1x32xf32, #tpu.memory_space<vmem>>, vector<1x32xf32>
    %8 = vector.broadcast %7 : vector<1x32xf32> to vector<128x32xf32>
    %9 = arith.addf %6, %8 : vector<128x32xf32>
    %cst_10 = arith.constant 0.000000e+00 : f32
    %10 = vector.broadcast %cst_10 : f32 to vector<128x32xf32>
    %11 = arith.maximumf %9, %10 : vector<128x32xf32>
    %c0_11 = arith.constant 0 : index
    %c0_12 = arith.constant 0 : index
    %12 = vector.load %arg6[%c0_11, %c0_12] : memref<32x32xf32, #tpu.memory_space<vmem>>, vector<32x32xf32>
    %cst_13 = arith.constant dense<0.000000e+00> : vector<128x32xf32>
    %13 = tpu.matmul %11, %12, %cst_13 {dimension_numbers = #tpu.dot_dimension_numbers<[1], [0], [0], [1], [0, 0, 1, 1], [], []>} : vector<128x32xf32>, vector<32x32xf32>, vector<128x32xf32> -> vector<128x32xf32>
    %c0_14 = arith.constant 0 : index
    %c0_15 = arith.constant 0 : index
    %14 = vector.load %arg7[%c0_14, %c0_15] : memref<1x32xf32, #tpu.memory_space<vmem>>, vector<1x32xf32>
    %15 = vector.broadcast %14 : vector<1x32xf32> to vector<128x32xf32>
    %16 = arith.addf %13, %15 : vector<128x32xf32>
    %cst_16 = arith.constant 0.000000e+00 : f32
    %17 = vector.broadcast %cst_16 : f32 to vector<128x32xf32>
    %18 = arith.maximumf %16, %17 : vector<128x32xf32>
    %c0_17 = arith.constant 0 : index
    %c0_18 = arith.constant 0 : index
    %19 = vector.load %arg8[%c0_17, %c0_18] : memref<1x32xf32, #tpu.memory_space<vmem>>, vector<1x32xf32>
    %cst_19 = arith.constant dense<0.000000e+00> : vector<1x128xf32>
    %20 = tpu.matmul %19, %18, %cst_19 {dimension_numbers = #tpu.dot_dimension_numbers<[1], [1], [0], [0], [0, 0, 1, 0], [], []>} : vector<1x32xf32>, vector<128x32xf32>, vector<1x128xf32> -> vector<1x128xf32>
    %c0_20 = arith.constant 0 : index
    %c0_21 = arith.constant 0 : index
    %21 = memref.load %arg9[%c0_20, %c0_21] : memref<1x1xf32, #tpu.memory_space<smem>>
    %22 = vector.broadcast %21 : f32 to vector<1x128xf32>
    %23 = arith.addf %20, %22 : vector<1x128xf32>
    %c0_22 = arith.constant 0 : index
    %c0_23 = arith.constant 0 : index
    %24 = vector.load %arg10[%c0_22, %c0_23] : memref<1x128xf32, #tpu.memory_space<vmem>>, vector<1x128xf32>
    tpu.vector_store %arg10[%c0_22, %c0_23], %23 {strides = array<i32>} : memref<1x128xf32, #tpu.memory_space<vmem>>, vector<1x128xf32>,
    return
  }
  func.func @transform_0(%arg0: i32) -> (i32, i32) {
    %c0_i32 = arith.constant 0 : i32
    %c0_i32_0 = arith.constant 0 : i32
    return %arg0, %c0_i32 : i32, i32
  }
  func.func @transform_1(%arg0: i32) -> (i32, i32) {
    %c0_i32 = arith.constant 0 : i32
    %c0_i32_0 = arith.constant 0 : i32
    return %arg0, %c0_i32 : i32, i32
  }
  func.func @transform_2(%arg0: i32) -> (i32, i32) {
    %c0_i32 = arith.constant 0 : i32
    %c0_i32_0 = arith.constant 0 : i32
    %c0_i32_1 = arith.constant 0 : i32
    return %c0_i32, %c0_i32_0 : i32, i32
  }
  func.func @transform_3(%arg0: i32) -> (i32, i32) {
    %c0_i32 = arith.constant 0 : i32
    %c0_i32_0 = arith.constant 0 : i32
    %c0_i32_1 = arith.constant 0 : i32
    return %c0_i32, %c0_i32_0 : i32, i32
  }
  func.func @transform_4(%arg0: i32) -> (i32, i32) {
    %c0_i32 = arith.constant 0 : i32
    %c0_i32_0 = arith.constant 0 : i32
    %c0_i32_1 = arith.constant 0 : i32
    return %c0_i32, %c0_i32_0 : i32, i32
  }
  func.func @transform_5(%arg0: i32) -> (i32, i32) {
    %c0_i32 = arith.constant 0 : i32
    %c0_i32_0 = arith.constant 0 : i32
    %c0_i32_1 = arith.constant 0 : i32
    return %c0_i32, %c0_i32_0 : i32, i32
  }
  func.func @transform_6(%arg0: i32) -> (i32, i32) {
    %c0_i32 = arith.constant 0 : i32
    %c0_i32_0 = arith.constant 0 : i32
    %c0_i32_1 = arith.constant 0 : i32
    return %c0_i32, %c0_i32_0 : i32, i32
  }
  func.func @transform_7(%arg0: i32) -> (i32, i32) {
    %c0_i32 = arith.constant 0 : i32
    %c0_i32_0 = arith.constant 0 : i32
    %c0_i32_1 = arith.constant 0 : i32
    return %c0_i32, %c0_i32_0 : i32, i32
  }
  func.func @transform_8(%arg0: i32) -> (i32, i32) {
    %c0_i32 = arith.constant 0 : i32
    %c0_i32_0 = arith.constant 0 : i32
    %c0_i32_1 = arith.constant 0 : i32
    return %c0_i32, %c0_i32_0 : i32, i32
  }
  func.func @transform_9(%arg0: i32) -> (i32, i32) {
    %c0_i32 = arith.constant 0 : i32
    %c0_i32_0 = arith.constant 0 : i32
    return %c0_i32, %arg0 : i32, i32
  }
}

</mosaic_0001>

<llo_original>
// kernel: tpu_custom_call.1
$region0: #{tpu_custom_call.1}
  #allocation0 [shape = 'u32[]', space=smem, size = 0x4, offset = 0x4, fixed_abs, tag = 'smem constant byte address 0x4 - core index']
  #allocation1 [shape = 'u32[72,128]{1,0:T(1,128)}', space=vmem, size = 0x9000, scoped, tag = 'internal scratch']
  #allocation2 [shape = 'f32[1,1]{1,0:T(1,128)S(6)}', space=smem, size = 0x200, scoped, tag = 'scoped memory for tpu_custom_call.1']
  %s0 = inlined_call_operand.vmem [shape: f32[256,6], index: 0, kind: input, shape index: {}]
  %s1 = inlined_call_operand.vmem [shape: f32[256,2], index: 1, kind: input, shape index: {}]
  %s2 = inlined_call_operand.vmem [shape: f32[6,32], index: 2, kind: input, shape index: {}]
  %s3 = inlined_call_operand.vmem [shape: f32[2,32], index: 3, kind: input, shape index: {}]
  %s4 = inlined_call_operand.vmem [shape: f32[1,32], index: 4, kind: input, shape index: {}]
  %s5 = inlined_call_operand.vmem [shape: f32[32,32], index: 5, kind: input, shape index: {}]
  %s6 = inlined_call_operand.vmem [shape: f32[1,32], index: 6, kind: input, shape index: {}]
  %s7 = inlined_call_operand.vmem [shape: f32[1,32], index: 7, kind: input, shape index: {}]
  %s8 = inlined_call_operand.<no memory space> [shape: f32[1,1], index: 8, kind: input, shape index: {}]
  %s9 = inlined_call_operand.hbm [shape: f32[1,256], index: 9, kind: output, shape index: {}]
  %s10 = sld [smem:[#allocation0]]
  $region69: #{tpu_custom_call.1} parent=0
    _
  %s12 = ssub.s32 1, %s10
  %s13 = scalar_select 0, %s12, %s10
  %14 = sst [smem:[#allocation2]] %s8
  $region1: #{tpu_custom_call.1} parent=0
    #allocation3 [shape = 'u8[1024]{0}', space=vmem, size = 0x400, scoped, tag = 'output window, operand 0']
    #allocation4 [shape = 's32[2]{0}', space=sflag, size = 0x8, scoped, tag = 'scoped memory for tpu_custom_call.1']
    %15 = vsyncpa [#allocation4], 0
    %s16 = scalar_lea.sflag [#allocation4], 1
    %17 = vsyncpa %s16, 0
    loop: start=0, step=1, limit=4
    $region2: #{tpu_custom_call.1} parent=1 // loop_pre_header
      _
    $region3: #{tpu_custom_call.1} parent=1 // loop_header
      %s19 = sphi 0, %s23
      %p20 = scmp.ge.s32.totalorder %s19, 4
      %s29 = sphi 0, %s31
      %s32 = sphi 0, %s29
      %s33 = sphi 0, %s32
      %s49 = sphi 0, %s33
      %s55 = sphi 0, %s57
      %s58 = sphi 0, %s55
      %s59 = sphi 0, %s58
      %s75 = sphi 0, %s59
      %s79 = sphi 0, %s79
      %s81 = sphi 0, %s79
      %s82 = sphi 0, %s81
      %s96 = sphi 0, %s82
      %s100 = sphi 0, %s100
      %s102 = sphi 0, %s100
      %s103 = sphi 0, %s102
      %s117 = sphi 0, %s103
      %s121 = sphi 0, %s121
      %s123 = sphi 0, %s121
      %s124 = sphi 0, %s123
      %s138 = sphi 0, %s124
      %s142 = sphi 0, %s142
      %s144 = sphi 0, %s142
      %s145 = sphi 0, %s144
      %s159 = sphi 0, %s145
      %s163 = sphi 0, %s163
      %s165 = sphi 0, %s163
      %s166 = sphi 0, %s165
      %s180 = sphi 0, %s166
      %s184 = sphi 0, %s184
      %s186 = sphi 0, %s184
      %s187 = sphi 0, %s186
      %s201 = sphi 0, %s187
      %s205 = sphi 0, %s205
      %s207 = sphi 0, %s205
      %s208 = sphi 0, %s207
      %s222 = sphi 0, %s208
      %s228 = sphi 0, %s230
      %s231 = sphi 0, %s228
      %s232 = sphi 0, %s231
      %s248 = sphi 0, %s232
    $region4: #{tpu_custom_call.1} parent=1 // loop_header_branch
      %22 = sbr.rel (%p20) target = $region8
    $region5: #{tpu_custom_call.1} parent=1 // loop_body
      %s24 = ssub.s32 %s19, 1
      %s25 = ssub.s32 %s19, 2
      %s26 = sadd.s32 %s19, 1
      %s27 = ssub.s32 %s19, %s26
      %p28 = scmp.eq.s32.totalorder %s27, 0
      %s30 = sadd.s32 %s29, 1
      %s31 = scalar_select %p28, %s29, %s30
      %p34 = pneg %p28
      %p35 = scmp.eq.s32.totalorder %s19, 1
      %p36 = por %p34, %p35
      %p37 = scmp.ne.s32.totalorder %s29, %s32
      %p38 = scmp.eq.s32.totalorder %s19, 0
      %p39 = por %p37, %p38
      %p40 = scmp.ne.s32.totalorder %s29, %s32
      %p41 = scmp.eq.s32.totalorder %s24, 1
      %p42 = por %p40, %p41
      %p43 = scmp.ne.s32.totalorder %s32, %s33
      %p44 = scmp.eq.s32.totalorder %s24, 0
      %p45 = por %p43, %p44
      %p46 = scmp.ne.s32.totalorder %s32, %s33
      %p47 = scmp.eq.s32.totalorder %s25, 1
      %p48 = por %p46, %p47
      %p50 = scmp.ne.s32.totalorder %s33, %s49
      %p51 = scmp.eq.s32.totalorder %s25, 0
      %p52 = por %p50, %p51
      %s53 = ssub.s32 %s19, %s26
      %p54 = scmp.eq.s32.totalorder %s53, 0
      %s56 = sadd.s32 %s55, 1
      %s57 = scalar_select %p54, %s55, %s56
      %p60 = pneg %p54
      %p61 = scmp.eq.s32.totalorder %s19, 1
      %p62 = por %p60, %p61
      %p63 = scmp.ne.s32.totalorder %s55, %s58
      %p64 = scmp.eq.s32.totalorder %s19, 0
      %p65 = por %p63, %p64
      %p66 = scmp.ne.s32.totalorder %s55, %s58
      %p67 = scmp.eq.s32.totalorder %s24, 1
      %p68 = por %p66, %p67
      %p69 = scmp.ne.s32.totalorder %s58, %s59
      %p70 = scmp.eq.s32.totalorder %s24, 0
      %p71 = por %p69, %p70
      %p72 = scmp.ne.s32.totalorder %s58, %s59
      %p73 = scmp.eq.s32.totalorder %s25, 1
      %p74 = por %p72, %p73
      %p76 = scmp.ne.s32.totalorder %s59, %s75
      %p77 = scmp.eq.s32.totalorder %s25, 0
      %p78 = por %p76, %p77
      %s80 = sadd.s32 %s79, 1
      %p83 = scmp.eq.s32.totalorder %s19, 1
      %p84 = scmp.ne.s32.totalorder %s79, %s81
      %p85 = scmp.eq.s32.totalorder %s19, 0
      %p86 = por %p84, %p85
      %p87 = scmp.ne.s32.totalorder %s79, %s81
      %p88 = scmp.eq.s32.totalorder %s24, 1
      %p89 = por %p87, %p88
      %p90 = scmp.ne.s32.totalorder %s81, %s82
      %p91 = scmp.eq.s32.totalorder %s24, 0
      %p92 = por %p90, %p91
      %p93 = scmp.ne.s32.totalorder %s81, %s82
      %p94 = scmp.eq.s32.totalorder %s25, 1
      %p95 = por %p93, %p94
      %p97 = scmp.ne.s32.totalorder %s82, %s96
      %p98 = scmp.eq.s32.totalorder %s25, 0
      %p99 = por %p97, %p98
      %s101 = sadd.s32 %s100, 1
      %p104 = scmp.eq.s32.totalorder %s19, 1
      %p105 = scmp.ne.s32.totalorder %s100, %s102
      %p106 = scmp.eq.s32.totalorder %s19, 0
      %p107 = por %p105, %p106
      %p108 = scmp.ne.s32.totalorder %s100, %s102
      %p109 = scmp.eq.s32.totalorder %s24, 1
      %p110 = por %p108, %p109
      %p111 = scmp.ne.s32.totalorder %s102, %s103
      %p112 = scmp.eq.s32.totalorder %s24, 0
      %p113 = por %p111, %p112
      %p114 = scmp.ne.s32.totalorder %s102, %s103
      %p115 = scmp.eq.s32.totalorder %s25, 1
      %p116 = por %p114, %p115
      %p118 = scmp.ne.s32.totalorder %s103, %s117
      %p119 = scmp.eq.s32.totalorder %s25, 0
      %p120 = por %p118, %p119
      %s122 = sadd.s32 %s121, 1
      %p125 = scmp.eq.s32.totalorder %s19, 1
      %p126 = scmp.ne.s32.totalorder %s121, %s123
      %p127 = scmp.eq.s32.totalorder %s19, 0
      %p128 = por %p126, %p127
      %p129 = scmp.ne.s32.totalorder %s121, %s123
      %p130 = scmp.eq.s32.totalorder %s24, 1
      %p131 = por %p129, %p130
      %p132 = scmp.ne.s32.totalorder %s123, %s124
      %p133 = scmp.eq.s32.totalorder %s24, 0
      %p134 = por %p132, %p133
      %p135 = scmp.ne.s32.totalorder %s123, %s124
      %p136 = scmp.eq.s32.totalorder %s25, 1
      %p137 = por %p135, %p136
      %p139 = scmp.ne.s32.totalorder %s124, %s138
      %p140 = scmp.eq.s32.totalorder %s25, 0
      %p141 = por %p139, %p140
      %s143 = sadd.s32 %s142, 1
      %p146 = scmp.eq.s32.totalorder %s19, 1
      %p147 = scmp.ne.s32.totalorder %s142, %s144
      %p148 = scmp.eq.s32.totalorder %s19, 0
      %p149 = por %p147, %p148
      %p150 = scmp.ne.s32.totalorder %s142, %s144
      %p151 = scmp.eq.s32.totalorder %s24, 1
      %p152 = por %p150, %p151
      %p153 = scmp.ne.s32.totalorder %s144, %s145
      %p154 = scmp.eq.s32.totalorder %s24, 0
      %p155 = por %p153, %p154
      %p156 = scmp.ne.s32.totalorder %s144, %s145
      %p157 = scmp.eq.s32.totalorder %s25, 1
      %p158 = por %p156, %p157
      %p160 = scmp.ne.s32.totalorder %s145, %s159
      %p161 = scmp.eq.s32.totalorder %s25, 0
      %p162 = por %p160, %p161
      %s164 = sadd.s32 %s163, 1
      %p167 = scmp.eq.s32.totalorder %s19, 1
      %p168 = scmp.ne.s32.totalorder %s163, %s165
      %p169 = scmp.eq.s32.totalorder %s19, 0
      %p170 = por %p168, %p169
      %p171 = scmp.ne.s32.totalorder %s163, %s165
      %p172 = scmp.eq.s32.totalorder %s24, 1
      %p173 = por %p171, %p172
      %p174 = scmp.ne.s32.totalorder %s165, %s166
      %p175 = scmp.eq.s32.totalorder %s24, 0
      %p176 = por %p174, %p175
      %p177 = scmp.ne.s32.totalorder %s165, %s166
      %p178 = scmp.eq.s32.totalorder %s25, 1
      %p179 = por %p177, %p178
      %p181 = scmp.ne.s32.totalorder %s166, %s180
      %p182 = scmp.eq.s32.totalorder %s25, 0
      %p183 = por %p181, %p182
      %s185 = sadd.s32 %s184, 1
      %p188 = scmp.eq.s32.totalorder %s19, 1
      %p189 = scmp.ne.s32.totalorder %s184, %s186
      %p190 = scmp.eq.s32.totalorder %s19, 0
      %p191 = por %p189, %p190
      %p192 = scmp.ne.s32.totalorder %s184, %s186
      %p193 = scmp.eq.s32.totalorder %s24, 1
      %p194 = por %p192, %p193
      %p195 = scmp.ne.s32.totalorder %s186, %s187
      %p196 = scmp.eq.s32.totalorder %s24, 0
      %p197 = por %p195, %p196
      %p198 = scmp.ne.s32.totalorder %s186, %s187
      %p199 = scmp.eq.s32.totalorder %s25, 1
      %p200 = por %p198, %p199
      %p202 = scmp.ne.s32.totalorder %s187, %s201
      %p203 = scmp.eq.s32.totalorder %s25, 0
      %p204 = por %p202, %p203
      %s206 = sadd.s32 %s205, 1
      %p209 = scmp.eq.s32.totalorder %s19, 1
      %p210 = scmp.ne.s32.totalorder %s205, %s207
      %p211 = scmp.eq.s32.totalorder %s19, 0
      %p212 = por %p210, %p211
      %p213 = scmp.ne.s32.totalorder %s205, %s207
      %p214 = scmp.eq.s32.totalorder %s24, 1
      %p215 = por %p213, %p214
      %p216 = scmp.ne.s32.totalorder %s207, %s208
      %p217 = scmp.eq.s32.totalorder %s24, 0
      %p218 = por %p216, %p217
      %p219 = scmp.ne.s32.totalorder %s207, %s208
      %p220 = scmp.eq.s32.totalorder %s25, 1
      %p221 = por %p219, %p220
      %p223 = scmp.ne.s32.totalorder %s208, %s222
      %p224 = scmp.eq.s32.totalorder %s25, 0
      %p225 = por %p223, %p224
      %s226 = ssub.s32 %s19, %s26
      %p227 = scmp.eq.s32.totalorder %s226, 0
      %s229 = sadd.s32 %s228, 1
      %s230 = scalar_select %p227, %s228, %s229
      %p233 = pneg %p227
      %p234 = scmp.eq.s32.totalorder %s19, 1
      %p235 = por %p233, %p234
      %p236 = scmp.ne.s32.totalorder %s228, %s231
      %p237 = scmp.eq.s32.totalorder %s19, 0
      %p238 = por %p236, %p237
      %p239 = scmp.ne.s32.totalorder %s228, %s231
      %p240 = scmp.eq.s32.totalorder %s24, 1
      %p241 = por %p239, %p240
      %p242 = scmp.ne.s32.totalorder %s231, %s232
      %p243 = scmp.eq.s32.totalorder %s24, 0
      %p244 = por %p242, %p243
      %p245 = scmp.ne.s32.totalorder %s231, %s232
      %p246 = scmp.eq.s32.totalorder %s25, 1
      %p247 = por %p245, %p246
      %p249 = scmp.ne.s32.totalorder %s232, %s248
      %p250 = scmp.eq.s32.totalorder %s25, 0
      %p251 = por %p249, %p250
      %p252 = scmp.le.s32.totalorder 1, %s19
      %p253 = scmp.lt.s32.totalorder %s19, 3
      %p254 = pnand %p252, %p253
      %p255 = pneg %p254
      // Predicated region
      $region9: #{tpu_custom_call.1} parent=5 // pred_check
        _
      $region10: #{tpu_custom_call.1} parent=5 // pred_check_branch
        %257 = sbr.rel (%p254) target = $region12
      $region11: #{tpu_custom_call.1} parent=5 // pred_region
        %s258 = ssub.s32 %s19, 1
        // Predicated region
        $region13: #{tpu_custom_call.1} parent=11 // pred_check
          %p259 = pneg %p92
        $region14: #{tpu_custom_call.1} parent=11 // pred_check_branch
          %261 = sbr.rel (%p259) target = $region16
        $region15: #{tpu_custom_call.1} parent=11 // pred_region
          _
        $region16: #{tpu_custom_call.1} parent=11 // pred_fallthru
          _
        // Predicated region
        $region17: #{tpu_custom_call.1} parent=11 // pred_check
          %p262 = pneg %p113
        $region18: #{tpu_custom_call.1} parent=11 // pred_check_branch
          %264 = sbr.rel (%p262) target = $region20
        $region19: #{tpu_custom_call.1} parent=11 // pred_region
          _
        $region20: #{tpu_custom_call.1} parent=11 // pred_fallthru
          _
        // Predicated region
        $region21: #{tpu_custom_call.1} parent=11 // pred_check
          %p265 = pneg %p134
        $region22: #{tpu_custom_call.1} parent=11 // pred_check_branch
          %267 = sbr.rel (%p265) target = $region24
        $region23: #{tpu_custom_call.1} parent=11 // pred_region
          _
        $region24: #{tpu_custom_call.1} parent=11 // pred_fallthru
          _
        // Predicated region
        $region25: #{tpu_custom_call.1} parent=11 // pred_check
          %p268 = pneg %p155
        $region26: #{tpu_custom_call.1} parent=11 // pred_check_branch
          %270 = sbr.rel (%p268) target = $region28
        $region27: #{tpu_custom_call.1} parent=11 // pred_region
          _
        $region28: #{tpu_custom_call.1} parent=11 // pred_fallthru
          _
        // Predicated region
        $region29: #{tpu_custom_call.1} parent=11 // pred_check
          %p271 = pneg %p176
        $region30: #{tpu_custom_call.1} parent=11 // pred_check_branch
          %273 = sbr.rel (%p271) target = $region32
        $region31: #{tpu_custom_call.1} parent=11 // pred_region
          _
        $region32: #{tpu_custom_call.1} parent=11 // pred_fallthru
          _
        // Predicated region
        $region33: #{tpu_custom_call.1} parent=11 // pred_check
          %p274 = pneg %p197
        $region34: #{tpu_custom_call.1} parent=11 // pred_check_branch
          %276 = sbr.rel (%p274) target = $region36
        $region35: #{tpu_custom_call.1} parent=11 // pred_region
          _
        $region36: #{tpu_custom_call.1} parent=11 // pred_fallthru
          _
        // Predicated region
        $region37: #{tpu_custom_call.1} parent=11 // pred_check
          %p277 = pneg %p218
        $region38: #{tpu_custom_call.1} parent=11 // pred_check_branch
          %279 = sbr.rel (%p277) target = $region40
        $region39: #{tpu_custom_call.1} parent=11 // pred_region
          _
        $region40: #{tpu_custom_call.1} parent=11 // pred_fallthru
          _
      $region12: #{tpu_custom_call.1} parent=5 // pred_fallthru
        _
      %p280 = scmp.lt.s32.totalorder %s19, 2
      // Predicated region
      $region41: #{tpu_custom_call.1} parent=5 // pred_check
        %p281 = pneg %p280
      $region42: #{tpu_custom_call.1} parent=5 // pred_check_branch
        %283 = sbr.rel (%p281) target = $region44
      $region43: #{tpu_custom_call.1} parent=5 // pred_region
        // Predicated region
        $region45: #{tpu_custom_call.1} parent=43 // pred_check
          %p284 = pneg %p39
        $region46: #{tpu_custom_call.1} parent=43 // pred_check_branch
          %286 = sbr.rel (%p284) target = $region48
        $region47: #{tpu_custom_call.1} parent=43 // pred_region
          %s287 = smul.u32 16, %s19
          %p288 = scmp.lt.s32.totalorder %s287, 31
          %s289 = scalar_select %p288, %s287, 31
          %s290 = smul.addr %s289, 8
          %s291 = scalar_lea.vmem %s0, %s290
          %s292 = smul.u32 16, %s19
        $region48: #{tpu_custom_call.1} parent=43 // pred_fallthru
          _
        // Predicated region
        $region49: #{tpu_custom_call.1} parent=43 // pred_check
          %p293 = pneg %p65
        $region50: #{tpu_custom_call.1} parent=43 // pred_check_branch
          %295 = sbr.rel (%p293) target = $region52
        $region51: #{tpu_custom_call.1} parent=43 // pred_region
          %s296 = smul.u32 16, %s19
          %p297 = scmp.lt.s32.totalorder %s296, 31
          %s298 = scalar_select %p297, %s296, 31
          %s299 = smul.addr %s298, 8
          %s300 = scalar_lea.vmem %s1, %s299
          %s301 = smul.u32 16, %s19
        $region52: #{tpu_custom_call.1} parent=43 // pred_fallthru
          _
      $region44: #{tpu_custom_call.1} parent=5 // pred_fallthru
        _
      %p302 = scmp.le.s32.totalorder 1, %s19
      %p303 = scmp.lt.s32.totalorder %s19, 3
      %p304 = pnand %p302, %p303
      %p305 = pneg %p304
      // Predicated region
      $region53: #{tpu_custom_call.1} parent=5 // pred_check
        _
      $region54: #{tpu_custom_call.1} parent=5 // pred_check_branch
        %307 = sbr.rel (%p304) target = $region56
      $region55: #{tpu_custom_call.1} parent=5 // pred_region
        %s308 = ssub.s32 %s19, 1
        %s309 = smul.u32 16, %s24
        %p310 = scmp.lt.s32.totalorder %s309, 31
        %s311 = scalar_select %p310, %s309, 31
        %s312 = smul.addr %s311, 8
        %s313 = scalar_lea.vmem %s0, %s312
        %p314 = pneg %p45
        %p315 = pneg %p42
        %s316 = smul.u32 16, %s24
        %p317 = scmp.lt.s32.totalorder %s316, 31
        %s318 = scalar_select %p317, %s316, 31
        %s319 = smul.addr %s318, 8
        %s320 = scalar_lea.vmem %s1, %s319
        %p321 = pneg %p71
        %p322 = pneg %p68
        %p323 = pneg %p92
        %p324 = pneg %p89
        %p325 = pneg %p113
        %p326 = pneg %p110
        %p327 = pneg %p134
        %p328 = pneg %p131
        %p329 = pneg %p155
        %p330 = pneg %p152
        %p331 = pneg %p176
        %p332 = pneg %p173
        %p333 = pneg %p197
        %p334 = pneg %p194
        %p335 = pneg %p218
        %p336 = pneg %p215
        %p337 = pneg %p244
        %p338 = pneg %p241
        %s339 = sand.u32 %s231, 1
        %s340 = scalar_lea.sflag [#allocation4], %s339
        %s341 = sand.u32 %s231, 1
        %s342 = scalar_lea.vmem [#allocation3], %s341
        %s343 = smul.u32 16, %s24
        %p344 = scmp.lt.s32.totalorder %s343, 31
        %s345 = scalar_select %p344, %s343, 31
        %s346 = smul.addr %s345, 8
        %s347 = scalar_lea.vmem %s0, %s346
        %s348 = smul.u32 16, %s24
        %s349 = smul.u32 16, %s24
        %p350 = scmp.lt.s32.totalorder %s349, 31
        %s351 = scalar_select %p350, %s349, 31
        %s352 = smul.addr %s351, 8
        %s353 = scalar_lea.vmem %s1, %s352
        %s354 = smul.u32 16, %s24
        %v355 = vld [vmem:[%s347] sm:$0xff]
        %v356 = vld [vmem:[%s347 + $0x8] sm:$0xff]
        %v357 = vld [vmem:[%s347 + $0x10] sm:$0xff]
        %v358 = vld [vmem:[%s347 + $0x18] sm:$0xff]
        %v359 = vld [vmem:[%s347 + $0x20] sm:$0xff]
        %v360 = vld [vmem:[%s347 + $0x28] sm:$0xff]
        %v361 = vld [vmem:[%s347 + $0x30] sm:$0xff]
        %v362 = vld [vmem:[%s347 + $0x38] sm:$0xff]
        %v363 = vld [vmem:[%s347 + $0x40] sm:$0xff]
        %v364 = vld [vmem:[%s347 + $0x48] sm:$0xff]
        %v365 = vld [vmem:[%s347 + $0x50] sm:$0xff]
        %v366 = vld [vmem:[%s347 + $0x58] sm:$0xff]
        %v367 = vld [vmem:[%s347 + $0x60] sm:$0xff]
        %v368 = vld [vmem:[%s347 + $0x68] sm:$0xff]
        %v369 = vld [vmem:[%s347 + $0x70] sm:$0xff]
        %v370 = vld [vmem:[%s347 + $0x78] sm:$0xff]
        %v371 = vld [vmem:[%s2] sm:$0x3f]
        %v372 = vld [vmem:[%s353] sm:$0xff]
        %v373 = vld [vmem:[%s353 + $0x8] sm:$0xff]
        %v374 = vld [vmem:[%s353 + $0x10] sm:$0xff]
        %v375 = vld [vmem:[%s353 + $0x18] sm:$0xff]
        %v376 = vld [vmem:[%s353 + $0x20] sm:$0xff]
        %v377 = vld [vmem:[%s353 + $0x28] sm:$0xff]
        %v378 = vld [vmem:[%s353 + $0x30] sm:$0xff]
        %v379 = vld [vmem:[%s353 + $0x38] sm:$0xff]
        %v380 = vld [vmem:[%s353 + $0x40] sm:$0xff]
        %v381 = vld [vmem:[%s353 + $0x48] sm:$0xff]
        %v382 = vld [vmem:[%s353 + $0x50] sm:$0xff]
        %v383 = vld [vmem:[%s353 + $0x58] sm:$0xff]
        %v384 = vld [vmem:[%s353 + $0x60] sm:$0xff]
        %v385 = vld [vmem:[%s353 + $0x68] sm:$0xff]
        %v386 = vld [vmem:[%s353 + $0x70] sm:$0xff]
        %v387 = vld [vmem:[%s353 + $0x78] sm:$0xff]
        %v388 = vld [vmem:[%s3] sm:$0x3]
        %vm389 = vcmask 15360
        %v391 = vsel %vm389, %v372, 0
        %v394 = vsel %vm389, %v373, 0
        %v397 = vsel %vm389, %v374, 0
        %v400 = vsel %vm389, %v375, 0
        %v403 = vsel %vm389, %v376, 0
        %v406 = vsel %vm389, %v377, 0
        %v409 = vsel %vm389, %v378, 0
        %v412 = vsel %vm389, %v379, 0
        %v415 = vsel %vm389, %v380, 0
        %v418 = vsel %vm389, %v381, 0
        %v421 = vsel %vm389, %v382, 0
        %v424 = vsel %vm389, %v383, 0
        %v427 = vsel %vm389, %v384, 0
        %v430 = vsel %vm389, %v385, 0
        %v433 = vsel %vm389, %v386, 0
        %v436 = vsel %vm389, %v387, 0
        %vm438 = vcmask 1041408
        %v440 = vsel %vm438, %v388, 0
        %442 = vmatpush.msra.mxu0 0.0
        %443 = vmatpush.msra.mxu0 0.0
        %444 = vmatpush.msra.mxu0 0.0
        %445 = vmatpush.msra.mxu0 0.0
        %446 = vmatpush.msra.mxu0 0.0
        %447 = vmatpush.msra.mxu0 0.0
        %448 = vmatpush.msra.mxu0 0.0
        %449 = vmatpush.msra.mxu0 0.0
        %450 = vmatpush.msra.mxu0 0.0
        %451 = vmatpush.msra.mxu0 0.0
        %452 = vmatpush.msra.mxu0 0.0
        %453 = vmatpush.msra.mxu0 0.0
        %454 = vmatpush.msra.mxu0 0.0
        %455 = vmatpush.msra.mxu0 0.0
        %456 = vmatpush.msra.mxu0 0.0
        %457 = vmatpush.msra.mxu0 %v440
        %458 = vmatmul.f32.gmra.mxu0 %v391
        %v459 = vpop.f32.mrf.mxu0
        %v460 = vadd.f32 0.0, %v459
        %461 = vmatmul.f32.gmra.mxu0 %v394
        %v462 = vpop.f32.mrf.mxu0
        %v463 = vadd.f32 0.0, %v462
        %464 = vmatmul.f32.gmra.mxu0 %v397
        %v465 = vpop.f32.mrf.mxu0
        %v466 = vadd.f32 0.0, %v465
        %467 = vmatmul.f32.gmra.mxu0 %v400
        %v468 = vpop.f32.mrf.mxu0
        %v469 = vadd.f32 0.0, %v468
        %470 = vmatmul.f32.gmra.mxu0 %v403
        %v471 = vpop.f32.mrf.mxu0
        %v472 = vadd.f32 0.0, %v471
        %473 = vmatmul.f32.gmra.mxu0 %v406
        %v474 = vpop.f32.mrf.mxu0
        %v475 = vadd.f32 0.0, %v474
        %476 = vmatmul.f32.gmra.mxu0 %v409
        %v477 = vpop.f32.mrf.mxu0
        %v478 = vadd.f32 0.0, %v477
        %479 = vmatmul.f32.gmra.mxu0 %v412
        %v480 = vpop.f32.mrf.mxu0
        %v481 = vadd.f32 0.0, %v480
        %482 = vmatmul.f32.gmra.mxu0 %v415
        %v483 = vpop.f32.mrf.mxu0
        %v484 = vadd.f32 0.0, %v483
        %485 = vmatmul.f32.gmra.mxu0 %v418
        %v486 = vpop.f32.mrf.mxu0
        %v487 = vadd.f32 0.0, %v486
        %488 = vmatmul.f32.gmra.mxu0 %v421
        %v489 = vpop.f32.mrf.mxu0
        %v490 = vadd.f32 0.0, %v489
        %491 = vmatmul.f32.gmra.mxu0 %v424
        %v492 = vpop.f32.mrf.mxu0
        %v493 = vadd.f32 0.0, %v492
        %494 = vmatmul.f32.gmra.mxu0 %v427
        %v495 = vpop.f32.mrf.mxu0
        %v496 = vadd.f32 0.0, %v495
        %497 = vmatmul.f32.gmra.mxu0 %v430
        %v498 = vpop.f32.mrf.mxu0
        %v499 = vadd.f32 0.0, %v498
        %500 = vmatmul.f32.gmra.mxu0 %v433
        %v501 = vpop.f32.mrf.mxu0
        %v502 = vadd.f32 0.0, %v501
        %503 = vmatmul.f32.gmra.mxu0 %v436
        %v504 = vpop.f32.mrf.mxu0
        %v505 = vadd.f32 0.0, %v504
        %506 = vdwg.mxu0
        %vm507 = vcmask 48128
        %v509 = vsel %vm507, %v355, 0
        %v512 = vsel %vm507, %v356, 0
        %v515 = vsel %vm507, %v357, 0
        %v518 = vsel %vm507, %v358, 0
        %v521 = vsel %vm507, %v359, 0
        %v524 = vsel %vm507, %v360, 0
        %v527 = vsel %vm507, %v361, 0
        %v530 = vsel %vm507, %v362, 0
        %v533 = vsel %vm507, %v363, 0
        %v536 = vsel %vm507, %v364, 0
        %v539 = vsel %vm507, %v365, 0
        %v542 = vsel %vm507, %v366, 0
        %v545 = vsel %vm507, %v367, 0
        %v548 = vsel %vm507, %v368, 0
        %v551 = vsel %vm507, %v369, 0
        %v554 = vsel %vm507, %v370, 0
        %vm556 = vcmask 1045504
        %v558 = vsel %vm556, %v371, 0
        %560 = vmatpush.msra.mxu0 0.0
        %561 = vmatpush.msra.mxu0 0.0
        %562 = vmatpush.msra.mxu0 0.0
        %563 = vmatpush.msra.mxu0 0.0
        %564 = vmatpush.msra.mxu0 0.0
        %565 = vmatpush.msra.mxu0 0.0
        %566 = vmatpush.msra.mxu0 0.0
        %567 = vmatpush.msra.mxu0 0.0
        %568 = vmatpush.msra.mxu0 0.0
        %569 = vmatpush.msra.mxu0 0.0
        %570 = vmatpush.msra.mxu0 0.0
        %571 = vmatpush.msra.mxu0 0.0
        %572 = vmatpush.msra.mxu0 0.0
        %573 = vmatpush.msra.mxu0 0.0
        %574 = vmatpush.msra.mxu0 0.0
        %575 = vmatpush.msra.mxu0 %v558
        %576 = vmatmul.f32.gmra.mxu0 %v509
        %v577 = vpop.f32.mrf.mxu0
        %v578 = vadd.f32 %v460, %v577
        %579 = vmatmul.f32.gmra.mxu0 %v512
        %v580 = vpop.f32.mrf.mxu0
        %v581 = vadd.f32 %v463, %v580
        %582 = vmatmul.f32.gmra.mxu0 %v515
        %v583 = vpop.f32.mrf.mxu0
        %v584 = vadd.f32 %v466, %v583
        %585 = vmatmul.f32.gmra.mxu0 %v518
        %v586 = vpop.f32.mrf.mxu0
        %v587 = vadd.f32 %v469, %v586
        %588 = vmatmul.f32.gmra.mxu0 %v521
        %v589 = vpop.f32.mrf.mxu0
        %v590 = vadd.f32 %v472, %v589
        %591 = vmatmul.f32.gmra.mxu0 %v524
        %v592 = vpop.f32.mrf.mxu0
        %v593 = vadd.f32 %v475, %v592
        %594 = vmatmul.f32.gmra.mxu0 %v527
        %v595 = vpop.f32.mrf.mxu0
        %v596 = vadd.f32 %v478, %v595
        %597 = vmatmul.f32.gmra.mxu0 %v530
        %v598 = vpop.f32.mrf.mxu0
        %v599 = vadd.f32 %v481, %v598
        %600 = vmatmul.f32.gmra.mxu0 %v533
        %v601 = vpop.f32.mrf.mxu0
        %v602 = vadd.f32 %v484, %v601
        %603 = vmatmul.f32.gmra.mxu0 %v536
        %v604 = vpop.f32.mrf.mxu0
        %v605 = vadd.f32 %v487, %v604
        %606 = vmatmul.f32.gmra.mxu0 %v539
        %v607 = vpop.f32.mrf.mxu0
        %v608 = vadd.f32 %v490, %v607
        %609 = vmatmul.f32.gmra.mxu0 %v542
        %v610 = vpop.f32.mrf.mxu0
        %v611 = vadd.f32 %v493, %v610
        %612 = vmatmul.f32.gmra.mxu0 %v545
        %v613 = vpop.f32.mrf.mxu0
        %v614 = vadd.f32 %v496, %v613
        %615 = vmatmul.f32.gmra.mxu0 %v548
        %v616 = vpop.f32.mrf.mxu0
        %v617 = vadd.f32 %v499, %v616
        %618 = vmatmul.f32.gmra.mxu0 %v551
        %v619 = vpop.f32.mrf.mxu0
        %v620 = vadd.f32 %v502, %v619
        %621 = vmatmul.f32.gmra.mxu0 %v554
        %v622 = vpop.f32.mrf.mxu0
        %v623 = vadd.f32 %v505, %v622
        %624 = vdwg.mxu0
        %v625 = vld [vmem:[%s4] sm:$0x1]
        %v627 = vperm.slane %v625, 0
        %v629 = vadd.f32 %v578, %v627
        %v630 = vadd.f32 %v581, %v627
        %v631 = vadd.f32 %v584, %v627
        %v632 = vadd.f32 %v587, %v627
        %v633 = vadd.f32 %v590, %v627
        %v634 = vadd.f32 %v593, %v627
        %v635 = vadd.f32 %v596, %v627
        %v636 = vadd.f32 %v599, %v627
        %v637 = vadd.f32 %v602, %v627
        %v638 = vadd.f32 %v605, %v627
        %v639 = vadd.f32 %v608, %v627
        %v640 = vadd.f32 %v611, %v627
        %v641 = vadd.f32 %v614, %v627
        %v642 = vadd.f32 %v617, %v627
        %v643 = vadd.f32 %v620, %v627
        %v644 = vadd.f32 %v623, %v627
        %v645 = vmax.f32 %v629, 0.0
        %v646 = vmax.f32 %v630, 0.0
        %v647 = vmax.f32 %v631, 0.0
        %v648 = vmax.f32 %v632, 0.0
        %v649 = vmax.f32 %v633, 0.0
        %v650 = vmax.f32 %v634, 0.0
        %v651 = vmax.f32 %v635, 0.0
        %v652 = vmax.f32 %v636, 0.0
        %v653 = vmax.f32 %v637, 0.0
        %v654 = vmax.f32 %v638, 0.0
        %v655 = vmax.f32 %v639, 0.0
        %v656 = vmax.f32 %v640, 0.0
        %v657 = vmax.f32 %v641, 0.0
        %v658 = vmax.f32 %v642, 0.0
        %v659 = vmax.f32 %v643, 0.0
        %v660 = vmax.f32 %v644, 0.0
        %v661 = vld [vmem:[%s5] sm:$0xff]
        %v662 = vld [vmem:[%s5 + $0x8] sm:$0xff]
        %v663 = vld [vmem:[%s5 + $0x10] sm:$0xff]
        %v664 = vld [vmem:[%s5 + $0x18] sm:$0xff]
        %v665 = vld [vmem:[%s6] sm:$0x1]
        %v667 = vperm.slane %v665, 0
        %vm669 = vcmask 261120
        %v671 = vsel %vm669, %v645, 0
        %v674 = vsel %vm669, %v646, 0
        %v677 = vsel %vm669, %v647, 0
        %v680 = vsel %vm669, %v648, 0
        %v683 = vsel %vm669, %v649, 0
        %v686 = vsel %vm669, %v650, 0
        %v689 = vsel %vm669, %v651, 0
        %v692 = vsel %vm669, %v652, 0
        %v695 = vsel %vm669, %v653, 0
        %v698 = vsel %vm669, %v654, 0
        %v701 = vsel %vm669, %v655, 0
        %v704 = vsel %vm669, %v656, 0
        %v707 = vsel %vm669, %v657, 0
        %v710 = vsel %vm669, %v658, 0
        %v713 = vsel %vm669, %v659, 0
        %v716 = vsel %vm669, %v660, 0
        %718 = vmatpush.msra.mxu0 0.0
        %719 = vmatpush.msra.mxu0 0.0
        %720 = vmatpush.msra.mxu0 0.0
        %721 = vmatpush.msra.mxu0 0.0
        %722 = vmatpush.msra.mxu0 0.0
        %723 = vmatpush.msra.mxu0 0.0
        %724 = vmatpush.msra.mxu0 0.0
        %725 = vmatpush.msra.mxu0 0.0
        %726 = vmatpush.msra.mxu0 0.0
        %727 = vmatpush.msra.mxu0 0.0
        %728 = vmatpush.msra.mxu0 0.0
        %729 = vmatpush.msra.mxu0 0.0
        %730 = vmatpush.msra.mxu0 %v664
        %731 = vmatpush.msra.mxu0 %v663
        %732 = vmatpush.msra.mxu0 %v662
        %733 = vmatpush.msra.mxu0 %v661
        %734 = vmatmul.f32.gmra.mxu0 %v671
        %v735 = vpop.f32.mrf.mxu0
        %v736 = vadd.f32 %v667, %v735
        %737 = vmatmul.f32.gmra.mxu0 %v674
        %v738 = vpop.f32.mrf.mxu0
        %v739 = vadd.f32 %v667, %v738
        %740 = vmatmul.f32.gmra.mxu0 %v677
        %v741 = vpop.f32.mrf.mxu0
        %v742 = vadd.f32 %v667, %v741
        %743 = vmatmul.f32.gmra.mxu0 %v680
        %v744 = vpop.f32.mrf.mxu0
        %v745 = vadd.f32 %v667, %v744
        %746 = vmatmul.f32.gmra.mxu0 %v683
        %v747 = vpop.f32.mrf.mxu0
        %v748 = vadd.f32 %v667, %v747
        %749 = vmatmul.f32.gmra.mxu0 %v686
        %v750 = vpop.f32.mrf.mxu0
        %v751 = vadd.f32 %v667, %v750
        %752 = vmatmul.f32.gmra.mxu0 %v689
        %v753 = vpop.f32.mrf.mxu0
        %v754 = vadd.f32 %v667, %v753
        %755 = vmatmul.f32.gmra.mxu0 %v692
        %v756 = vpop.f32.mrf.mxu0
        %v757 = vadd.f32 %v667, %v756
        %758 = vmatmul.f32.gmra.mxu0 %v695
        %v759 = vpop.f32.mrf.mxu0
        %v760 = vadd.f32 %v667, %v759
        %761 = vmatmul.f32.gmra.mxu0 %v698
        %v762 = vpop.f32.mrf.mxu0
        %v763 = vadd.f32 %v667, %v762
        %764 = vmatmul.f32.gmra.mxu0 %v701
        %v765 = vpop.f32.mrf.mxu0
        %v766 = vadd.f32 %v667, %v765
        %767 = vmatmul.f32.gmra.mxu0 %v704
        %v768 = vpop.f32.mrf.mxu0
        %v769 = vadd.f32 %v667, %v768
        %770 = vmatmul.f32.gmra.mxu0 %v707
        %v771 = vpop.f32.mrf.mxu0
        %v772 = vadd.f32 %v667, %v771
        %773 = vmatmul.f32.gmra.mxu0 %v710
        %v774 = vpop.f32.mrf.mxu0
        %v775 = vadd.f32 %v667, %v774
        %776 = vmatmul.f32.gmra.mxu0 %v713
        %v777 = vpop.f32.mrf.mxu0
        %v778 = vadd.f32 %v667, %v777
        %779 = vmatmul.f32.gmra.mxu0 %v716
        %v780 = vpop.f32.mrf.mxu0
        %v781 = vadd.f32 %v667, %v780
        %782 = vdwg.mxu0
        %v783 = vmax.f32 %v736, 0.0
        %v784 = vmax.f32 %v739, 0.0
        %v785 = vmax.f32 %v742, 0.0
        %v786 = vmax.f32 %v745, 0.0
        %v787 = vmax.f32 %v748, 0.0
        %v788 = vmax.f32 %v751, 0.0
        %v789 = vmax.f32 %v754, 0.0
        %v790 = vmax.f32 %v757, 0.0
        %v791 = vmax.f32 %v760, 0.0
        %v792 = vmax.f32 %v763, 0.0
        %v793 = vmax.f32 %v766, 0.0
        %v794 = vmax.f32 %v769, 0.0
        %v795 = vmax.f32 %v772, 0.0
        %v796 = vmax.f32 %v775, 0.0
        %v797 = vmax.f32 %v778, 0.0
        %v798 = vmax.f32 %v781, 0.0
        %v799 = vld [vmem:[%s7] sm:$0x1]
        %s800 = sld [smem:[#allocation2]]
        %v801 = vstv %s800
        %v803 = vsel %vm669, %v799, 0
        %v806 = vsel %vm669, %v783, 0
        %v809 = vsel %vm669, %v784, 0
        %v812 = vsel %vm669, %v785, 0
        %v815 = vsel %vm669, %v786, 0
        %v818 = vsel %vm669, %v787, 0
        %v821 = vsel %vm669, %v788, 0
        %v824 = vsel %vm669, %v789, 0
        %v827 = vsel %vm669, %v790, 0
        %v830 = vsel %vm669, %v791, 0
        %v833 = vsel %vm669, %v792, 0
        %v836 = vsel %vm669, %v793, 0
        %v839 = vsel %vm669, %v794, 0
        %v842 = vsel %vm669, %v795, 0
        %v845 = vsel %vm669, %v796, 0
        %v848 = vsel %vm669, %v797, 0
        %v851 = vsel %vm669, %v798, 0
        %853 = vmatpush.xpose.msra.mxu0 %v851
        %854 = vmatpush.xpose.msra.mxu0 %v848
        %855 = vmatpush.xpose.msra.mxu0 %v845
        %856 = vmatpush.xpose.msra.mxu0 %v842
        %857 = vmatpush.xpose.msra.mxu0 %v839
        %858 = vmatpush.xpose.msra.mxu0 %v836
        %859 = vmatpush.xpose.msra.mxu0 %v833
        %860 = vmatpush.xpose.msra.mxu0 %v830
        %861 = vmatpush.xpose.msra.mxu0 %v827
        %862 = vmatpush.xpose.msra.mxu0 %v824
        %863 = vmatpush.xpose.msra.mxu0 %v821
        %864 = vmatpush.xpose.msra.mxu0 %v818
        %865 = vmatpush.xpose.msra.mxu0 %v815
        %866 = vmatpush.xpose.msra.mxu0 %v812
        %867 = vmatpush.xpose.msra.mxu0 %v809
        %868 = vmatpush.xpose.msra.mxu0 %v806
        %869 = vmatmul.f32.gmra.mxu0 %v803
        %v870 = vpop.f32.mrf.mxu0
        %v871 = vadd.f32 %v801, %v870
        %872 = vdwg.mxu0
        %873 = vst [vmem:[%s342] sm:$0x1] %v871
        %s874 = sand.u32 %s231, 1
        %s875 = scalar_lea.sflag [#allocation4], %s874
        %s876 = sand.u32 %s231, 1
        %s877 = scalar_lea.vmem [#allocation3], %s876
        // Predicated region
        $region57: #{tpu_custom_call.1} parent=55 // pred_check
          %p878 = pneg %p241
        $region58: #{tpu_custom_call.1} parent=55 // pred_check_branch
          %880 = sbr.rel (%p878) target = $region60
        $region59: #{tpu_custom_call.1} parent=55 // pred_region
          %882 = vsyncadd %s875, 0
          %s883 = scalar_lea.hbm %s9, %s24
          %s885 = sshll.u32 %s877, 4
          %s886 = int_to_ptr.vmem [resolvable:$true] %s885
          %s887 = sshll.u32 %s883, 4
          %s888 = int_to_ptr.hbm [resolvable:$true] %s887
          %890 = dma.vmem_to_hbm [thread:$0]  %s886, 16, %s888, %s875
        $region60: #{tpu_custom_call.1} parent=55 // pred_fallthru
          _
      $region56: #{tpu_custom_call.1} parent=5 // pred_fallthru
        _
      %p891 = scmp.le.s32.totalorder 2, %s19
      // Predicated region
      $region61: #{tpu_custom_call.1} parent=5 // pred_check
        %p892 = pneg %p891
      $region62: #{tpu_custom_call.1} parent=5 // pred_check_branch
        %894 = sbr.rel (%p892) target = $region64
      $region63: #{tpu_custom_call.1} parent=5 // pred_region
        %s895 = ssub.s32 %s19, 2
        // Predicated region
        $region65: #{tpu_custom_call.1} parent=63 // pred_check
          %p896 = pneg %p247
        $region66: #{tpu_custom_call.1} parent=63 // pred_check_branch
          %898 = sbr.rel (%p896) target = $region68
        $region67: #{tpu_custom_call.1} parent=63 // pred_region
          %s899 = sand.u32 %s232, 1
          %s900 = scalar_lea.sflag [#allocation4], %s899
          %s901 = sand.u32 %s232, 1
          %s902 = scalar_lea.vmem [#allocation3], %s901
          %904 = dma.done %s900, 16
        $region68: #{tpu_custom_call.1} parent=63 // pred_fallthru
          _
      $region64: #{tpu_custom_call.1} parent=5 // pred_fallthru
        _
    $region6: #{tpu_custom_call.1} parent=1 // loop_footer
      %s23 = sadd.s32 1, %s19
    $region7: #{tpu_custom_call.1} parent=1 // loop_footer_branch
      %18 = sbr.rel target = $region3
    $region8: #{tpu_custom_call.1} parent=1 // loop_exit
      _
    %905 = vsyncpa [#allocation4], 1
    %s906 = scalar_lea.sflag [#allocation4], 1
    %907 = vsyncpa %s906, 1

</llo_original>
